<compile_context>
chip_gen: v5e
topology: v5e:2x2
jax: 0.10.0
libtpu: 0.0.40
codegen_flags: <defaults>
</compile_context>

<pallas_src>
import functools
import math
from functools import partial

import jax
import jax.numpy as jnp
from jax.experimental import pallas as pl
from jax.experimental.pallas import tpu as pltpu

LANE = 128     # TPU lane width (minor-dim tile)
MIN_TB = 16    # sublane multiple for bf16 second-to-last dim


def _round_up(n, m):
    return ((n + m - 1) // m) * m


def _cdiv(a, b):
    return -(-a // b)


def _softplus(x):
    # numerically stable softplus, used identically in kernel and reference
    return jnp.maximum(x, 0.0) + jnp.log1p(jnp.exp(-jnp.abs(x)))


# ----------------------------------------------------------------------------
# Tiny feature probes (run once, cached).  They keep the kernel robust: if the
# optional features are unavailable we degrade to the previously-validated
# wide-slab / double-buffered design instead of failing.
# ----------------------------------------------------------------------------
@functools.lru_cache(maxsize=None)
def _roll_direction():
    """+1 if pltpu.roll matches jnp.roll (data moves to higher lane index),
    -1 if it rotates the other way, 0 if lane roll is unusable."""
    try:
        x = jnp.arange(8 * LANE, dtype=jnp.float32).reshape(8, LANE)

        def k(x_ref, o_ref):
            o_ref[...] = pltpu.roll(x_ref[...], 1, axis=1)

        y = pl.pallas_call(
            k, out_shape=jax.ShapeDtypeStruct((8, LANE), jnp.float32))(x)
        y00 = float(y[0, 0])
        if y00 == float(LANE - 1):
            return 1
        if y00 == 1.0:
            return -1
        return 0
    except Exception:                      # robustness probe
        return 0


@functools.lru_cache(maxsize=None)
def _buffered_one_supported():
    """True if pl.Buffered(1) (single-buffer grid-invariant operands) lowers."""
    try:
        def k(x_ref, w_ref, o_ref):
            o_ref[...] = x_ref[...] + w_ref[...]

        f = pl.pallas_call(
            k,
            out_shape=jax.ShapeDtypeStruct((2 * MIN_TB, LANE), jnp.float32),
            grid_spec=pltpu.PrefetchScalarGridSpec(
                num_scalar_prefetch=0,
                grid=(2,),
                in_specs=[
                    pl.BlockSpec((MIN_TB, LANE), lambda i: (i, 0)),
                    pl.BlockSpec((MIN_TB, LANE), lambda i: (0, 0),
                                 pipeline_mode=pl.Buffered(1)),
                ],
                out_specs=pl.BlockSpec((MIN_TB, LANE), lambda i: (i, 0)),
            ),
        )
        x = jnp.ones((2 * MIN_TB, LANE), jnp.float32)
        w = jnp.ones((MIN_TB, LANE), jnp.float32)
        jax.block_until_ready(f(x, w))
        return True
    except Exception:                      # robustness probe
        return False


# ----------------------------------------------------------------------------
# Kernel
# ----------------------------------------------------------------------------
def _actor_critic_kernel(x_ref, w1_ref, b1_ref, w2_ref, b2_ref,
                         wh_ref, bh_ref, eps_ref, lpc_ref, out_ref,
                         *, out_p, out_dim, compact, roll_fwd):
    x = x_ref[...]                                            # (TB, INP_P) bf16

    # z = relu(linear1(x))
    z = jnp.dot(x, w1_ref[...], preferred_element_type=jnp.float32) + b1_ref[...]
    z = jnp.maximum(z, 0.0)

    # z = relu(linear2(z))
    z = jnp.dot(z.astype(jnp.bfloat16), w2_ref[...],
                preferred_element_type=jnp.float32) + b2_ref[...]
    z = jnp.maximum(z, 0.0)

    # fused heads: 128-aligned column blocks [mean_pre | std_pre | value]
    h = jnp.dot(z.astype(jnp.bfloat16), wh_ref[...],
                preferred_element_type=jnp.float32) + bh_ref[...]

    mean = jnp.tanh(h[:, 0:out_p])
    std = _softplus(h[:, out_p:2 * out_p])
    value = h[:, 2 * out_p:2 * out_p + LANE]

    eps = eps_ref[...]                                        # (1, out_p)
    action = mean + std * eps
    # logp = -0.5*eps^2 - log(std) - 0.5*log(2*pi); eps-only part precomputed.
    logp = lpc_ref[...] - jnp.log(std)

    if compact:
        # Pack [action|logp|mean|std|value] into a single 128-lane block using
        # XLU rolls + masks, then ONE unmasked 128-wide store per row.
        rows = x.shape[0]
        lane = jax.lax.broadcasted_iota(jnp.int32, (rows, LANE), 1)
        pieces = ((action, out_dim), (logp, out_dim), (mean, out_dim),
                  (std, out_dim), (value, 1))
        packed = jnp.zeros((rows, LANE), jnp.float32)
        off = 0
        for blk, width in pieces:
            if off == 0:
                shifted = blk
            else:
                shift = off if roll_fwd else (LANE - off)
                shifted = pltpu.roll(blk, shift=shift, axis=1)
            mask = (lane >= off) & (lane < off + width)
            packed = packed + jnp.where(mask, shifted, 0.0)
            off += width
        out_ref[...] = packed
    else:
        # Wide fallback (kept f32 so the fallback stays bit-comparable to ref):
        # 128-aligned blocks [action | logp | mean | std | value].
        out_ref[:, 0:out_p] = action
        out_ref[:, out_p:2 * out_p] = logp
        out_ref[:, 2 * out_p:3 * out_p] = mean
        out_ref[:, 3 * out_p:4 * out_p] = std
        out_ref[:, 4 * out_p:4 * out_p + LANE] = value


# ----------------------------------------------------------------------------
# Wrapper
# ----------------------------------------------------------------------------
@partial(jax.jit, static_argnames=("out_dim", "out_p", "tb", "n_tiles",
                                   "compact", "use_buffered", "roll_fwd"))
def _forward_impl(x, kp, eps, *, out_dim, out_p, tb, n_tiles, compact,
                  use_buffered, roll_fwd):
    inp_p, hid_p = kp["w1"].shape
    head_w = kp["wh"].shape[1]
    B, inp_dim = x.shape
    b_pad = n_tiles * tb
    out_w = LANE if compact else 4 * out_p + LANE

    # Skip the whole-input pad+cast round trip when x is already aligned bf16.
    if B == b_pad and inp_dim == inp_p and x.dtype == jnp.bfloat16:
        xp = x
    else:
        xp = jnp.zeros((b_pad, inp_p), jnp.bfloat16)
        xp = xp.at[:B, :inp_dim].set(x.astype(jnp.bfloat16))

    eps_p = jnp.zeros((1, out_p), jnp.float32).at[:, :out_dim].set(
        eps.reshape(1, -1).astype(jnp.float32))
    lpc = -0.5 * eps_p * eps_p - jnp.float32(0.5 * math.log(2.0 * math.pi))

    # --- explicit VMEM budget: resident weights (x1 or x2 buffers) +
    #     double-buffered x tile + double-buffered output slab, with headroom.
    weight_bytes = (inp_p * hid_p + hid_p * hid_p + hid_p * head_w) * 2  # bf16
    small_bytes = (2 * hid_p + head_w + 2 * out_p) * 4                   # f32
    wbuf = 1 if use_buffered else 2
    stream_bytes = 2 * tb * (inp_p * 2 + out_w * 4)
    vmem_limit = int(1.25 * (wbuf * (weight_bytes + small_bytes) + stream_bytes))
    vmem_limit = min(max(vmem_limit + (2 << 20), 16 << 20), 64 << 20)
    # NOTE(v7x): if this approaches 64 MiB, K-tile the hidden dim (extra
    # "arbitrary" grid axis + VMEM f32 accumulator) instead of resident w2.

    def inv_spec(shape):
        # Grid-invariant operand: constant index_map; single-buffer if possible.
        if use_buffered:
            return pl.BlockSpec(shape, lambda i: (0, 0),
                                pipeline_mode=pl.Buffered(1))
        return pl.BlockSpec(shape, lambda i: (0, 0))

    cost = pl.CostEstimate(
        flops=2 * b_pad * (inp_p * hid_p + hid_p * hid_p + hid_p * head_w),
        transcendentals=4 * b_pad * out_p,
        bytes_accessed=(b_pad * inp_p * 2 + weight_bytes + small_bytes
                        + b_pad * out_w * 4),
    )

    kernel = partial(_actor_critic_kernel, out_p=out_p, out_dim=out_dim,
                     compact=compact, roll_fwd=roll_fwd)

    slab = pl.pallas_call(
        kernel,
        out_shape=jax.ShapeDtypeStruct((b_pad, out_w), jnp.float32),
        grid_spec=pltpu.PrefetchScalarGridSpec(
            num_scalar_prefetch=0,
            grid=(n_tiles,),
            in_specs=[
                pl.BlockSpec((tb, inp_p), lambda i: (i, 0)),   # x tile (streamed)
                inv_spec((inp_p, hid_p)),                      # w1 (resident)
                inv_spec((1, hid_p)),                          # b1
                inv_spec((hid_p, hid_p)),                      # w2
                inv_spec((1, hid_p)),                          # b2
                inv_spec((hid_p, head_w)),                     # fused head W
                inv_spec((1, head_w)),                         # fused head b
                inv_spec((1, out_p)),                          # eps
                inv_spec((1, out_p)),                          # logp const
            ],
            out_specs=pl.BlockSpec((tb, out_w), lambda i: (i, 0)),
        ),
        compiler_params=pltpu.CompilerParams(
            dimension_semantics=("parallel",),
            vmem_limit_bytes=vmem_limit),
        cost_estimate=cost,
    )(xp, kp["w1"], kp["b1"], kp["w2"], kp["b2"], kp["wh"], kp["bh"],
      eps_p, lpc)

    if compact:
        d = out_dim
        action = slab[:B, 0:d]
        logp = slab[:B, d:2 * d]
        mean = slab[:B, 2 * d:3 * d]
        std = slab[:B, 3 * d:4 * d]
        value = slab[:B, 4 * d:4 * d + 1]
    else:
        action = slab[:B, 0:out_dim]
        logp = slab[:B, out_p:out_p + out_dim]
        mean = slab[:B, 2 * out_p:2 * out_p + out_dim]
        std = slab[:B, 3 * out_p:3 * out_p + out_dim]
        value = slab[:B, 4 * out_p:4 * out_p + 1]
    return action, logp, mean, std, value


def actor_critic_forward(x, kp, eps, *, out_dim, tb_cap=512):
    """ActorCritic forward. Returns (action, action_logProb, mean, std, value).

    tb_cap: max batch-tile rows; can be raised toward 1024-2048 on v5e/v6e
    (128 MiB VMEM) for large batches; keep lower on v7x (64 MiB, 2 TCs).
    """
    B, _ = x.shape
    inp_p, hid_p = kp["w1"].shape
    head_w = kp["wh"].shape[1]
    out_p = (head_w - LANE) // 2

    # Balanced batch tiling: minimize padded rows, and use >=2 grid steps when
    # the batch allows it so v7x's two TensorCores both get a "parallel" tile.
    n_tiles = max(_cdiv(B, tb_cap), 2 if B >= 2 * MIN_TB else 1)
    tb = _round_up(_cdiv(B, n_tiles), MIN_TB)

    want_compact = (4 * out_dim + 1 <= LANE) and (out_p == LANE)
    roll_dir = _roll_direction() if want_compact else 0
    compact = want_compact and (roll_dir != 0)

    return _forward_impl(
        x, kp, eps,
        out_dim=out_dim, out_p=out_p, tb=tb, n_tiles=n_tiles,
        compact=compact,
        use_buffered=_buffered_one_supported(),
        roll_fwd=(roll_dir >= 0))


# ----------------------------------------------------------------------------
# Parameters (PyTorch-like init) and pure-JAX reference
# ----------------------------------------------------------------------------
def init_params(key, inp_dim, hidden_dim, out_dim):
    """PyTorch-like uniform fan-in init; weights stored as (in, out), biases (1, out)."""
    keys = jax.random.split(key, 10)

    def linear(kw, kb, fan_in, fan_out):
        bound = 1.0 / math.sqrt(fan_in)
        w = jax.random.uniform(kw, (fan_in, fan_out), jnp.float32, -bound, bound)
        b = jax.random.uniform(kb, (1, fan_out), jnp.float32, -bound, bound)
        return w, b

    w1, b1 = linear(keys[0], keys[1], inp_dim, hidden_dim)
    w2, b2 = linear(keys[2], keys[3], hidden_dim, hidden_dim)
    wm, bm = linear(keys[4], keys[5], hidden_dim, out_dim)
    ws, bs = linear(keys[6], keys[7], hidden_dim, out_dim)
    wc, bc = linear(keys[8], keys[9], hidden_dim, 1)
    return dict(w1=w1, b1=b1, w2=w2, b2=b2, wm=wm, bm=bm,
                ws=ws, bs=bs, wc=wc, bc=bc)


def prepare_params(params, inp_dim, hidden_dim, out_dim):
    """Pad to lane width, fuse the three heads, cast matmul weights to bf16.
    (On v6e/v7x, if hidden_dim is a free design choice, pick a multiple of 256
    so the 256x256 MXU tiles are fully used; 128 is native on v5e.)"""
    inp_p = _round_up(inp_dim, LANE)
    hid_p = _round_up(hidden_dim, LANE)
    out_p = _round_up(out_dim, LANE)
    head_w = 2 * out_p + LANE

    def pad2(a, rows, cols):
        return jnp.zeros((rows, cols), jnp.float32).at[:a.shape[0], :a.shape[1]].set(a)

    w1 = pad2(params["w1"], inp_p, hid_p).astype(jnp.bfloat16)
    b1 = pad2(params["b1"], 1, hid_p)
    w2 = pad2(params["w2"], hid_p, hid_p).astype(jnp.bfloat16)
    b2 = pad2(params["b2"], 1, hid_p)

    wh = jnp.zeros((hid_p, head_w), jnp.float32)
    wh = wh.at[:hidden_dim, 0:out_dim].set(params["wm"])
    wh = wh.at[:hidden_dim, out_p:out_p + out_dim].set(params["ws"])
    wh = wh.at[:hidden_dim, 2 * out_p:2 * out_p + 1].set(params["wc"])
    wh = wh.astype(jnp.bfloat16)

    bh = jnp.zeros((1, head_w), jnp.float32)
    bh = bh.at[:, 0:out_dim].set(params["bm"])
    bh = bh.at[:, out_p:out_p + out_dim].set(params["bs"])
    bh = bh.at[:, 2 * out_p:2 * out_p + 1].set(params["bc"])

    return dict(w1=w1, b1=b1, w2=w2, b2=b2, wh=wh, bh=bh)


def ref_forward(x, p, eps):
    """Plain-JAX reference with the same bf16-operand / f32-accumulate numerics."""
    def lin(a, w, b):
        return jnp.dot(a.astype(jnp.bfloat16), w.astype(jnp.bfloat16),
                       preferred_element_type=jnp.float32) + b
    z = jnp.maximum(lin(x, p["w1"], p["b1"]), 0.0)
    z = jnp.maximum(lin(z, p["w2"], p["b2"]), 0.0)
    mean = jnp.tanh(lin(z, p["wm"], p["bm"]))
    std = _softplus(lin(z, p["ws"], p["bs"]))
    action = mean + std * eps
    logp = (-(action - mean) ** 2 / (2.0 * std ** 2)
            - jnp.log(std) - 0.5 * jnp.log(2.0 * jnp.pi))
    value = lin(z, p["wc"], p["bc"])
    return action, logp, mean, std, value


if __name__ == "__main__":
    inp_dim, hidden_dim, out_dim = 16, 32, 8

    key = jax.random.PRNGKey(0)
    k_params, k_data = jax.random.split(key)

    params = init_params(k_params, inp_dim, hidden_dim, out_dim)
    kparams = prepare_params(params, inp_dim, hidden_dim, out_dim)

    names = ("action", "action_logProb", "mean", "std", "value")
    # batch=2: single-tile grid; batch=50: balanced 2-tile "parallel" grid.
    for batch in (2, 50):
        kx, keps = jax.random.split(jax.random.fold_in(k_data, batch))
        x = jax.random.normal(kx, (batch, inp_dim), jnp.float32)
        # Shared standard-normal exploration noise, matching torch's
        # dist.sample() of shape (out_dim,) broadcast over the batch
        # (torch RNG replaced by an explicit jax.random input).
        eps = jax.random.normal(keps, (1, out_dim), jnp.float32)

        outs = actor_critic_forward(x, kparams, eps, out_dim=out_dim)
        jax.block_until_ready(outs)

        refs = ref_forward(x, params, eps)
        for name, o, r in zip(names, outs, refs):
            assert o.shape == r.shape and o.dtype == r.dtype, (name, o.shape, r.shape)
            assert jnp.allclose(o, r, atol=1e-4, rtol=1e-4), (name, o, r)

    print("KERNEL_OK")
</pallas_src>

<mosaic_0001>
module attributes {stable_mosaic.version = 11 : i64} {
  func.func @k(%arg0: memref<8x128xf32, #tpu.memory_space<vmem>>, %arg1: memref<8x128xf32, #tpu.memory_space<vmem>>) attributes {dimension_semantics = [], scalar_prefetch = 0 : i64, scratch_operands = 0 : i64, tpu.core_type = #tpu.core_type<tc>} {
    %c0 = arith.constant 0 : index
    %c0_0 = arith.constant 0 : index
    %0 = vector.load %arg0[%c0, %c0_0] : memref<8x128xf32, #tpu.memory_space<vmem>>, vector<8x128xf32>
    %c1_i32 = arith.constant 1 : i32
    %1 = tpu.dynamic_rotate %0 by %c1_i32 dim 1 : vector<8x128xf32>, i32 -> vector<8x128xf32>
    %c0_1 = arith.constant 0 : index
    %c0_2 = arith.constant 0 : index
    %2 = vector.load %arg1[%c0_1, %c0_2] : memref<8x128xf32, #tpu.memory_space<vmem>>, vector<8x128xf32>
    tpu.vector_store %arg1[%c0_1, %c0_2], %1 {strides = array<i32>} : memref<8x128xf32, #tpu.memory_space<vmem>>, vector<8x128xf32>,
    return
  }
}

module attributes {stable_mosaic.version = 11 : i64} {
  func.func @k(%arg0: i32, %arg1: memref<16x128xf32, #tpu.memory_space<vmem>>, %arg2: memref<16x128xf32, #tpu.memory_space<vmem>>, %arg3: memref<16x128xf32, #tpu.memory_space<vmem>>) attributes {dimension_semantics = [#tpu.dimension_semantics<arbitrary>], iteration_bounds = array<i64: 2>, scalar_prefetch = 0 : i64, scratch_operands = 0 : i64, tpu.core_type = #tpu.core_type<tc>, window_params = [{transform_indices = @transform_0, window_bounds = array<i64: 16, 128>}, {pipeline_mode = #tpu.pipeline_mode<synchronous>, transform_indices = @transform_1, window_bounds = array<i64: 16, 128>}, {transform_indices = @transform_2, window_bounds = array<i64: 16, 128>}]} {
    %c0 = arith.constant 0 : index
    %c0_0 = arith.constant 0 : index
    %0 = vector.load %arg1[%c0, %c0_0] : memref<16x128xf32, #tpu.memory_space<vmem>>, vector<16x128xf32>
    %c0_1 = arith.constant 0 : index
    %c0_2 = arith.constant 0 : index
    %1 = vector.load %arg2[%c0_1, %c0_2] : memref<16x128xf32, #tpu.memory_space<vmem>>, vector<16x128xf32>
    %2 = arith.addf %0, %1 : vector<16x128xf32>
    %c0_3 = arith.constant 0 : index
    %c0_4 = arith.constant 0 : index
    %3 = vector.load %arg3[%c0_3, %c0_4] : memref<16x128xf32, #tpu.memory_space<vmem>>, vector<16x128xf32>
    tpu.vector_store %arg3[%c0_3, %c0_4], %2 {strides = array<i32>} : memref<16x128xf32, #tpu.memory_space<vmem>>, vector<16x128xf32>,
    return
  }
  func.func @transform_0(%arg0: i32) -> (i32, i32) {
    %c0_i32 = arith.constant 0 : i32
    %c0_i32_0 = arith.constant 0 : i32
    return %arg0, %c0_i32 : i32, i32
  }
  func.func @transform_1(%arg0: i32) -> (i32, i32) {
    %c0_i32 = arith.constant 0 : i32
    %c0_i32_0 = arith.constant 0 : i32
    %c0_i32_1 = arith.constant 0 : i32
    return %c0_i32, %c0_i32_0 : i32, i32
  }
  func.func @transform_2(%arg0: i32) -> (i32, i32) {
    %c0_i32 = arith.constant 0 : i32
    %c0_i32_0 = arith.constant 0 : i32
    return %arg0, %c0_i32 : i32, i32
  }
}

module attributes {stable_mosaic.version = 11 : i64} {
  func.func @_actor_critic_kernel(%arg0: i32, %arg1: memref<16x128xbf16, #tpu.memory_space<vmem>>, %arg2: memref<128x128xbf16, #tpu.memory_space<vmem>>, %arg3: memref<1x128xf32, #tpu.memory_space<vmem>>, %arg4: memref<128x128xbf16, #tpu.memory_space<vmem>>, %arg5: memref<1x128xf32, #tpu.memory_space<vmem>>, %arg6: memref<128x384xbf16, #tpu.memory_space<vmem>>, %arg7: memref<1x384xf32, #tpu.memory_space<vmem>>, %arg8: memref<1x128xf32, #tpu.memory_space<vmem>>, %arg9: memref<1x128xf32, #tpu.memory_space<vmem>>, %arg10: memref<16x640xf32, #tpu.memory_space<vmem>>) attributes {dimension_semantics = [#tpu.dimension_semantics<parallel>], iteration_bounds = array<i64: 1>, scalar_prefetch = 0 : i64, scratch_operands = 0 : i64, tpu.core_type = #tpu.core_type<tc>, window_params = [{transform_indices = @transform_0, window_bounds = array<i64: 16, 128>}, {pipeline_mode = #tpu.pipeline_mode<synchronous>, transform_indices = @transform_1, window_bounds = array<i64: 128, 128>}, {pipeline_mode = #tpu.pipeline_mode<synchronous>, transform_indices = @transform_2, window_bounds = array<i64: 1, 128>}, {pipeline_mode = #tpu.pipeline_mode<synchronous>, transform_indices = @transform_3, window_bounds = array<i64: 128, 128>}, {pipeline_mode = #tpu.pipeline_mode<synchronous>, transform_indices = @transform_4, window_bounds = array<i64: 1, 128>}, {pipeline_mode = #tpu.pipeline_mode<synchronous>, transform_indices = @transform_5, window_bounds = array<i64: 128, 384>}, {pipeline_mode = #tpu.pipeline_mode<synchronous>, transform_indices = @transform_6, window_bounds = array<i64: 1, 384>}, {pipeline_mode = #tpu.pipeline_mode<synchronous>, transform_indices = @transform_7, window_bounds = array<i64: 1, 128>}, {pipeline_mode = #tpu.pipeline_mode<synchronous>, transform_indices = @transform_8, window_bounds = array<i64: 1, 128>}, {transform_indices = @transform_9, window_bounds = array<i64: 16, 640>}]} {
    %c0 = arith.constant 0 : index
    %c0_0 = arith.constant 0 : index
    %0 = vector.load %arg1[%c0, %c0_0] : memref<16x128xbf16, #tpu.memory_space<vmem>>, vector<16x128xbf16>
    %c0_1 = arith.constant 0 : index
    %c0_2 = arith.constant 0 : index
    %1 = vector.load %arg2[%c0_1, %c0_2] : memref<128x128xbf16, #tpu.memory_space<vmem>>, vector<128x128xbf16>
    %cst = arith.constant dense<0.000000e+00> : vector<16x128xf32>
    %2 = tpu.matmul %0, %1, %cst {dimension_numbers = #tpu.dot_dimension_numbers<[1], [0], [0], [1], [0, 0, 1, 1], [], []>} : vector<16x128xbf16>, vector<128x128xbf16>, vector<16x128xf32> -> vector<16x128xf32>
    %c0_3 = arith.constant 0 : index
    %c0_4 = arith.constant 0 : index
    %3 = vector.load %arg3[%c0_3, %c0_4] : memref<1x128xf32, #tpu.memory_space<vmem>>, vector<1x128xf32>
    %4 = vector.broadcast %3 : vector<1x128xf32> to vector<16x128xf32>
    %5 = arith.addf %2, %4 : vector<16x128xf32>
    %cst_5 = arith.constant 0.000000e+00 : f32
    %6 = vector.broadcast %cst_5 : f32 to vector<16x128xf32>
    %7 = arith.maximumf %5, %6 : vector<16x128xf32>
    %8 = arith.truncf %7 : vector<16x128xf32> to vector<16x128xbf16>
    %c0_6 = arith.constant 0 : index
    %c0_7 = arith.constant 0 : index
    %9 = vector.load %arg4[%c0_6, %c0_7] : memref<128x128xbf16, #tpu.memory_space<vmem>>, vector<128x128xbf16>
    %cst_8 = arith.constant dense<0.000000e+00> : vector<16x128xf32>
    %10 = tpu.matmul %8, %9, %cst_8 {dimension_numbers = #tpu.dot_dimension_numbers<[1], [0], [0], [1], [0, 0, 1, 1], [], []>} : vector<16x128xbf16>, vector<128x128xbf16>, vector<16x128xf32> -> vector<16x128xf32>
    %c0_9 = arith.constant 0 : index
    %c0_10 = arith.constant 0 : index
    %11 = vector.load %arg5[%c0_9, %c0_10] : memref<1x128xf32, #tpu.memory_space<vmem>>, vector<1x128xf32>
    %12 = vector.broadcast %11 : vector<1x128xf32> to vector<16x128xf32>
    %13 = arith.addf %10, %12 : vector<16x128xf32>
    %cst_11 = arith.constant 0.000000e+00 : f32
    %14 = vector.broadcast %cst_11 : f32 to vector<16x128xf32>
    %15 = arith.maximumf %13, %14 : vector<16x128xf32>
    %16 = arith.truncf %15 : vector<16x128xf32> to vector<16x128xbf16>
    %c0_12 = arith.constant 0 : index
    %c0_13 = arith.constant 0 : index
    %17 = vector.load %arg6[%c0_12, %c0_13] : memref<128x384xbf16, #tpu.memory_space<vmem>>, vector<128x384xbf16>
    %cst_14 = arith.constant dense<0.000000e+00> : vector<16x384xf32>
    %18 = tpu.matmul %16, %17, %cst_14 {dimension_numbers = #tpu.dot_dimension_numbers<[1], [0], [0], [1], [0, 0, 1, 1], [], []>} : vector<16x128xbf16>, vector<128x384xbf16>, vector<16x384xf32> -> vector<16x384xf32>
    %c0_15 = arith.constant 0 : index
    %c0_16 = arith.constant 0 : index
    %19 = vector.load %arg7[%c0_15, %c0_16] : memref<1x384xf32, #tpu.memory_space<vmem>>, vector<1x384xf32>
    %20 = vector.broadcast %19 : vector<1x384xf32> to vector<16x384xf32>
    %21 = arith.addf %18, %20 : vector<16x384xf32>
    %22 = vector.extract_strided_slice %21 {offsets = [0, 0], sizes = [16, 128], strides = [1, 1]} : vector<16x384xf32> to vector<16x128xf32>
    %23 = math.tanh %22 : vector<16x128xf32>
    %24 = vector.extract_strided_slice %21 {offsets = [0, 128], sizes = [16, 128], strides = [1, 1]} : vector<16x384xf32> to vector<16x128xf32>
    %cst_17 = arith.constant 0.000000e+00 : f32
    %25 = vector.broadcast %cst_17 : f32 to vector<16x128xf32>
    %26 = arith.maximumf %24, %25 : vector<16x128xf32>
    %27 = math.absf %24 : vector<16x128xf32>
    %cst_18 = arith.constant 0.000000e+00 : f32
    %28 = vector.broadcast %cst_18 : f32 to vector<16x128xf32>
    %29 = arith.subf %28, %27 : vector<16x128xf32>
    %30 = math.exp %29 : vector<16x128xf32>
    %31 = math.log1p %30 : vector<16x128xf32>
    %32 = arith.addf %26, %31 : vector<16x128xf32>
    %33 = vector.extract_strided_slice %21 {offsets = [0, 256], sizes = [16, 128], strides = [1, 1]} : vector<16x384xf32> to vector<16x128xf32>
    %c0_19 = arith.constant 0 : index
    %c0_20 = arith.constant 0 : index
    %34 = vector.load %arg8[%c0_19, %c0_20] : memref<1x128xf32, #tpu.memory_space<vmem>>, vector<1x128xf32>
    %35 = vector.broadcast %34 : vector<1x128xf32> to vector<16x128xf32>
    %36 = arith.mulf %32, %35 : vector<16x128xf32>
    %37 = arith.addf %23, %36 : vector<16x128xf32>
    %c0_21 = arith.constant 0 : index
    %c0_22 = arith.constant 0 : index
    %38 = vector.load %arg9[%c0_21, %c0_22] : memref<1x128xf32, #tpu.memory_space<vmem>>, vector<1x128xf32>
    %39 = math.log %32 : vector<16x128xf32>
    %40 = vector.broadcast %38 : vector<1x128xf32> to vector<16x128xf32>
    %41 = arith.subf %40, %39 : vector<16x128xf32>
    %c0_23 = arith.constant 0 : index
    %c0_24 = arith.constant 0 : index
    %42 = vector.load %arg10[%c0_23, %c0_24] : memref<16x640xf32, #tpu.memory_space<vmem>>, vector<16x128xf32>
    tpu.vector_store %arg10[%c0_23, %c0_24], %37 {strides = array<i32>} : memref<16x640xf32, #tpu.memory_space<vmem>>, vector<16x128xf32>,
    %c0_25 = arith.constant 0 : index
    %c128 = arith.constant 128 : index
    %43 = vector.load %arg10[%c0_25, %c128] : memref<16x640xf32, #tpu.memory_space<vmem>>, vector<16x128xf32>
    tpu.vector_store %arg10[%c0_25, %c128], %41 {strides = array<i32>} : memref<16x640xf32, #tpu.memory_space<vmem>>, vector<16x128xf32>,
    %c0_26 = arith.constant 0 : index
    %c256 = arith.constant 256 : index
    %44 = vector.load %arg10[%c0_26, %c256] : memref<16x640xf32, #tpu.memory_space<vmem>>, vector<16x128xf32>
    tpu.vector_store %arg10[%c0_26, %c256], %23 {strides = array<i32>} : memref<16x640xf32, #tpu.memory_space<vmem>>, vector<16x128xf32>,
    %c0_27 = arith.constant 0 : index
    %c384 = arith.constant 384 : index
    %45 = vector.load %arg10[%c0_27, %c384] : memref<16x640xf32, #tpu.memory_space<vmem>>, vector<16x128xf32>
    tpu.vector_store %arg10[%c0_27, %c384], %32 {strides = array<i32>} : memref<16x640xf32, #tpu.memory_space<vmem>>, vector<16x128xf32>,
    %c0_28 = arith.constant 0 : index
    %c512 = arith.constant 512 : index
    %46 = vector.load %arg10[%c0_28, %c512] : memref<16x640xf32, #tpu.memory_space<vmem>>, vector<16x128xf32>
    tpu.vector_store %arg10[%c0_28, %c512], %33 {strides = array<i32>} : memref<16x640xf32, #tpu.memory_space<vmem>>, vector<16x128xf32>,
    return
  }
  func.func @transform_0(%arg0: i32) -> (i32, i32) {
    %c0_i32 = arith.constant 0 : i32
    %c0_i32_0 = arith.constant 0 : i32
    return %arg0, %c0_i32 : i32, i32
  }
  func.func @transform_1(%arg0: i32) -> (i32, i32) {
    %c0_i32 = arith.constant 0 : i32
    %c0_i32_0 = arith.constant 0 : i32
    %c0_i32_1 = arith.constant 0 : i32
    return %c0_i32, %c0_i32_0 : i32, i32
  }
  func.func @transform_2(%arg0: i32) -> (i32, i32) {
    %c0_i32 = arith.constant 0 : i32
    %c0_i32_0 = arith.constant 0 : i32
    %c0_i32_1 = arith.constant 0 : i32
    return %c0_i32, %c0_i32_0 : i32, i32
  }
  func.func @transform_3(%arg0: i32) -> (i32, i32) {
    %c0_i32 = arith.constant 0 : i32
    %c0_i32_0 = arith.constant 0 : i32
    %c0_i32_1 = arith.constant 0 : i32
    return %c0_i32, %c0_i32_0 : i32, i32
  }
  func.func @transform_4(%arg0: i32) -> (i32, i32) {
    %c0_i32 = arith.constant 0 : i32
    %c0_i32_0 = arith.constant 0 : i32
    %c0_i32_1 = arith.constant 0 : i32
    return %c0_i32, %c0_i32_0 : i32, i32
  }
  func.func @transform_5(%arg0: i32) -> (i32, i32) {
    %c0_i32 = arith.constant 0 : i32
    %c0_i32_0 = arith.constant 0 : i32
    %c0_i32_1 = arith.constant 0 : i32
    return %c0_i32, %c0_i32_0 : i32, i32
  }
  func.func @transform_6(%arg0: i32) -> (i32, i32) {
    %c0_i32 = arith.constant 0 : i32
    %c0_i32_0 = arith.constant 0 : i32
    %c0_i32_1 = arith.constant 0 : i32
    return %c0_i32, %c0_i32_0 : i32, i32
  }
  func.func @transform_7(%arg0: i32) -> (i32, i32) {
    %c0_i32 = arith.constant 0 : i32
    %c0_i32_0 = arith.constant 0 : i32
    %c0_i32_1 = arith.constant 0 : i32
    return %c0_i32, %c0_i32_0 : i32, i32
  }
  func.func @transform_8(%arg0: i32) -> (i32, i32) {
    %c0_i32 = arith.constant 0 : i32
    %c0_i32_0 = arith.constant 0 : i32
    %c0_i32_1 = arith.constant 0 : i32
    return %c0_i32, %c0_i32_0 : i32, i32
  }
  func.func @transform_9(%arg0: i32) -> (i32, i32) {
    %c0_i32 = arith.constant 0 : i32
    %c0_i32_0 = arith.constant 0 : i32
    return %arg0, %c0_i32 : i32, i32
  }
}

</mosaic_0001>

<llo_original>
// kernel: tpu_custom_call.1
$region0: #{tpu_custom_call.1}
  #allocation0 [shape = 'u32[]', space=smem, size = 0x4, offset = 0x4, fixed_abs, tag = 'smem constant byte address 0x4 - core index']
  #allocation1 [shape = 'u32[72,128]{1,0:T(1,128)}', space=vmem, size = 0x9000, scoped, tag = 'internal scratch']
  %s0 = inlined_call_operand.hbm [shape: f32[8,128], index: 0, kind: input, shape index: {}]
  %s1 = inlined_call_operand.hbm [shape: f32[8,128], index: 1, kind: output, shape index: {}]
  %s2 = sld [smem:[#allocation0]]
  $region18: #{tpu_custom_call.1} parent=0
    _
  %s4 = ssub.s32 1, %s2
  %s5 = scalar_select 0, %s4, %s2
  $region1: #{tpu_custom_call.1} parent=0
    #allocation2 [shape = 'u8[4096]{0}', space=vmem, size = 0x1000, scoped, tag = 'input window, operand 0, single buffered']
    #allocation3 [shape = 's32[1]{0}', space=sflag, size = 0x4, scoped, tag = 'scoped memory for tpu_custom_call.1']
    #allocation4 [shape = 's32[1]{0}', space=sflag, size = 0x4, scoped, tag = 'scoped memory for tpu_custom_call.1']
    #allocation5 [shape = 'u8[4096]{0}', space=vmem, size = 0x1000, scoped, tag = 'output window, operand 0, single buffered']
    %6 = vsyncpa [#allocation3], 0
    %7 = vsyncpa [#allocation4], 0
    // Predicated region
    $region2: #{tpu_custom_call.1} parent=1 // pred_check
      _
    $region3: #{tpu_custom_call.1} parent=1 // pred_check_branch
      %9 = sbr.rel (0) target = $region5
    $region4: #{tpu_custom_call.1} parent=1 // pred_region
      %11 = vsyncadd [#allocation3], 0
      %s13 = sshll.u32 %s0, 4
      %s14 = int_to_ptr.hbm [resolvable:$true] %s13
      %s15 = sshll.u32 [#allocation2], 4
      %s16 = int_to_ptr.vmem [resolvable:$true] %s15
      %18 = dma.hbm_to_vmem [thread:$0]  %s14, 128, %s16, [#allocation3]
    $region5: #{tpu_custom_call.1} parent=1 // pred_fallthru
      _
    // Predicated region
    $region6: #{tpu_custom_call.1} parent=1 // pred_check
      _
    $region7: #{tpu_custom_call.1} parent=1 // pred_check_branch
      %20 = sbr.rel (0) target = $region9
    $region8: #{tpu_custom_call.1} parent=1 // pred_region
      %22 = dma.done [#allocation3], 128
    $region9: #{tpu_custom_call.1} parent=1 // pred_fallthru
      _
    %v23 = vld [vmem:[#allocation2] sm:$0xff]
    %24 = vrot.lane.b32.xlu0 %v23, 1
    %v25 = vpop.permute.xlu0 %24
    %26 = vst [vmem:[#allocation5] sm:$0xff] %v25
    // Predicated region
    $region10: #{tpu_custom_call.1} parent=1 // pred_check
      _
    $region11: #{tpu_custom_call.1} parent=1 // pred_check_branch
      %28 = sbr.rel (0) target = $region13
    $region12: #{tpu_custom_call.1} parent=1 // pred_region
      %30 = vsyncadd [#allocation4], 0
      %s32 = sshll.u32 [#allocation5], 4
      %s33 = int_to_ptr.vmem [resolvable:$true] %s32
      %s34 = sshll.u32 %s1, 4
      %s35 = int_to_ptr.hbm [resolvable:$true] %s34
      %37 = dma.vmem_to_hbm [thread:$0]  %s33, 128, %s35, [#allocation4]
    $region13: #{tpu_custom_call.1} parent=1 // pred_fallthru
      _
    // Predicated region
    $region14: #{tpu_custom_call.1} parent=1 // pred_check
      _
    $region15: #{tpu_custom_call.1} parent=1 // pred_check_branch
      %39 = sbr.rel (0) target = $region17
    $region16: #{tpu_custom_call.1} parent=1 // pred_region
      %41 = dma.done [#allocation4], 128
    $region17: #{tpu_custom_call.1} parent=1 // pred_fallthru
      _
    %42 = vsyncpa [#allocation3], 1
    %43 = vsyncpa [#allocation4], 1

// kernel: tpu_custom_call.1
$region0: #{tpu_custom_call.1}
  #allocation0 [shape = 'u32[]', space=smem, size = 0x4, offset = 0x4, fixed_abs, tag = 'smem constant byte address 0x4 - core index']
  #allocation1 [shape = 'u32[72,128]{1,0:T(1,128)}', space=vmem, size = 0x9000, scoped, tag = 'internal scratch']
  %s0 = inlined_call_operand.hbm [shape: f32[32,128], index: 0, kind: input, shape index: {}]
  %s1 = inlined_call_operand.hbm [shape: f32[16,128], index: 1, kind: input, shape index: {}]
  %s2 = inlined_call_operand.hbm [shape: f32[32,128], index: 2, kind: output, shape index: {}]
  %s3 = sld [smem:[#allocation0]]
  $region49: #{tpu_custom_call.1} parent=0
    _
  %s5 = ssub.s32 1, %s3
  %s6 = scalar_select 0, %s5, %s3
  $region1: #{tpu_custom_call.1} parent=0
    #allocation2 [shape = 'u8[16384]{0}', space=vmem, size = 0x4000, scoped, tag = 'input window, operand 0']
    #allocation3 [shape = 's32[2]{0}', space=sflag, size = 0x8, scoped, tag = 'scoped memory for tpu_custom_call.1']
    #allocation4 [shape = 's32[2]{0}', space=sflag, size = 0x8, scoped, tag = 'scoped memory for tpu_custom_call.1']
    #allocation5 [shape = 'u8[8192]{0}', space=vmem, size = 0x2000, scoped, tag = 'input window, operand 1, single buffered']
    #allocation6 [shape = 's32[1]{0}', space=sflag, size = 0x4, scoped, tag = 'scoped memory for tpu_custom_call.1']
    #allocation7 [shape = 'u8[16384]{0}', space=vmem, size = 0x4000, scoped, tag = 'output window, operand 0']
    %7 = vsyncpa [#allocation3], 0
    %s8 = scalar_lea.sflag [#allocation3], 1
    %9 = vsyncpa %s8, 0
    %10 = vsyncpa [#allocation6], 0
    %11 = vsyncpa [#allocation4], 0
    %s12 = scalar_lea.sflag [#allocation4], 1
    %13 = vsyncpa %s12, 0
    loop: start=0, step=1, limit=4
    $region2: #{tpu_custom_call.1} parent=1 // loop_pre_header
      _
    $region3: #{tpu_custom_call.1} parent=1 // loop_header
      %s15 = sphi 0, %s19
      %p16 = scmp.ge.s32.totalorder %s15, 4
      %s25 = sphi 0, %s27
      %s28 = sphi 0, %s25
      %s29 = sphi 0, %s28
      %s45 = sphi 0, %s29
      %s49 = sphi 0, %s49
      %s51 = sphi 0, %s49
      %s52 = sphi 0, %s51
      %s66 = sphi 0, %s52
      %s72 = sphi 0, %s74
      %s75 = sphi 0, %s72
      %s76 = sphi 0, %s75
      %s92 = sphi 0, %s76
    $region4: #{tpu_custom_call.1} parent=1 // loop_header_branch
      %18 = sbr.rel (%p16) target = $region8
    $region5: #{tpu_custom_call.1} parent=1 // loop_body
      %s20 = ssub.s32 %s15, 1
      %s21 = ssub.s32 %s15, 2
      %s22 = sadd.s32 %s15, 1
      %s23 = ssub.s32 %s15, %s22
      %p24 = scmp.eq.s32.totalorder %s23, 0
      %s26 = sadd.s32 %s25, 1
      %s27 = scalar_select %p24, %s25, %s26
      %p30 = pneg %p24
      %p31 = scmp.eq.s32.totalorder %s15, 1
      %p32 = por %p30, %p31
      %p33 = scmp.ne.s32.totalorder %s25, %s28
      %p34 = scmp.eq.s32.totalorder %s15, 0
      %p35 = por %p33, %p34
      %p36 = scmp.ne.s32.totalorder %s25, %s28
      %p37 = scmp.eq.s32.totalorder %s20, 1
      %p38 = por %p36, %p37
      %p39 = scmp.ne.s32.totalorder %s28, %s29
      %p40 = scmp.eq.s32.totalorder %s20, 0
      %p41 = por %p39, %p40
      %p42 = scmp.ne.s32.totalorder %s28, %s29
      %p43 = scmp.eq.s32.totalorder %s21, 1
      %p44 = por %p42, %p43
      %p46 = scmp.ne.s32.totalorder %s29, %s45
      %p47 = scmp.eq.s32.totalorder %s21, 0
      %p48 = por %p46, %p47
      %s50 = sadd.s32 %s49, 1
      %p53 = scmp.eq.s32.totalorder %s15, 1
      %p54 = scmp.ne.s32.totalorder %s49, %s51
      %p55 = scmp.eq.s32.totalorder %s15, 0
      %p56 = por %p54, %p55
      %p57 = scmp.ne.s32.totalorder %s49, %s51
      %p58 = scmp.eq.s32.totalorder %s20, 1
      %p59 = por %p57, %p58
      %p60 = scmp.ne.s32.totalorder %s51, %s52
      %p61 = scmp.eq.s32.totalorder %s20, 0
      %p62 = por %p60, %p61
      %p63 = scmp.ne.s32.totalorder %s51, %s52
      %p64 = scmp.eq.s32.totalorder %s21, 1
      %p65 = por %p63, %p64
      %p67 = scmp.ne.s32.totalorder %s52, %s66
      %p68 = scmp.eq.s32.totalorder %s21, 0
      %p69 = por %p67, %p68
      %s70 = ssub.s32 %s15, %s22
      %p71 = scmp.eq.s32.totalorder %s70, 0
      %s73 = sadd.s32 %s72, 1
      %s74 = scalar_select %p71, %s72, %s73
      %p77 = pneg %p71
      %p78 = scmp.eq.s32.totalorder %s15, 1
      %p79 = por %p77, %p78
      %p80 = scmp.ne.s32.totalorder %s72, %s75
      %p81 = scmp.eq.s32.totalorder %s15, 0
      %p82 = por %p80, %p81
      %p83 = scmp.ne.s32.totalorder %s72, %s75
      %p84 = scmp.eq.s32.totalorder %s20, 1
      %p85 = por %p83, %p84
      %p86 = scmp.ne.s32.totalorder %s75, %s76
      %p87 = scmp.eq.s32.totalorder %s20, 0
      %p88 = por %p86, %p87
      %p89 = scmp.ne.s32.totalorder %s75, %s76
      %p90 = scmp.eq.s32.totalorder %s21, 1
      %p91 = por %p89, %p90
      %p93 = scmp.ne.s32.totalorder %s76, %s92
      %p94 = scmp.eq.s32.totalorder %s21, 0
      %p95 = por %p93, %p94
      %p96 = scmp.le.s32.totalorder 1, %s15
      %p97 = scmp.lt.s32.totalorder %s15, 3
      %p98 = pnand %p96, %p97
      %p99 = pneg %p98
      // Predicated region
      $region9: #{tpu_custom_call.1} parent=5 // pred_check
        _
      $region10: #{tpu_custom_call.1} parent=5 // pred_check_branch
        %101 = sbr.rel (%p98) target = $region12
      $region11: #{tpu_custom_call.1} parent=5 // pred_region
        %s102 = ssub.s32 %s15, 1
        // Predicated region
        $region13: #{tpu_custom_call.1} parent=11 // pred_check
          %p103 = pneg %p62
        $region14: #{tpu_custom_call.1} parent=11 // pred_check_branch
          %105 = sbr.rel (%p103) target = $region16
        $region15: #{tpu_custom_call.1} parent=11 // pred_region
          %107 = vsyncadd [#allocation6], 0
          %s108 = sshll.u32 %s1, 4
          %s109 = int_to_ptr.hbm [resolvable:$true] %s108
          %s110 = sshll.u32 [#allocation5], 4
          %s111 = int_to_ptr.vmem [resolvable:$true] %s110
          %116 = dma.hbm_to_vmem [thread:$0]  %s109, 256, %s111, [#allocation6], 128, 128, 8
        $region16: #{tpu_custom_call.1} parent=11 // pred_fallthru
          _
      $region12: #{tpu_custom_call.1} parent=5 // pred_fallthru
        _
      %p117 = scmp.lt.s32.totalorder %s15, 2
      // Predicated region
      $region17: #{tpu_custom_call.1} parent=5 // pred_check
        %p118 = pneg %p117
      $region18: #{tpu_custom_call.1} parent=5 // pred_check_branch
        %120 = sbr.rel (%p118) target = $region20
      $region19: #{tpu_custom_call.1} parent=5 // pred_region
        // Predicated region
        $region21: #{tpu_custom_call.1} parent=19 // pred_check
          %p121 = pneg %p35
        $region22: #{tpu_custom_call.1} parent=19 // pred_check_branch
          %123 = sbr.rel (%p121) target = $region24
        $region23: #{tpu_custom_call.1} parent=19 // pred_region
          %s124 = sand.u32 %s25, 1
          %s125 = scalar_lea.sflag [#allocation3], %s124
          %s126 = sand.u32 %s25, 1
          %s127 = smul.addr %s126, 16
          %s128 = scalar_lea.vmem [#allocation2], %s127
          %s129 = smul.u32 2, %s15
          %131 = vsyncadd %s125, 0
          %s132 = smul.addr %s129, 8
          %s133 = scalar_lea.hbm %s0, %s132
          %s134 = sshll.u32 %s133, 4
          %s135 = int_to_ptr.hbm [resolvable:$true] %s134
          %s136 = sshll.u32 %s128, 4
          %s137 = int_to_ptr.vmem [resolvable:$true] %s136
          %142 = dma.hbm_to_vmem [thread:$0]  %s135, 256, %s137, %s125, 128, 128, 8
        $region24: #{tpu_custom_call.1} parent=19 // pred_fallthru
          _
      $region20: #{tpu_custom_call.1} parent=5 // pred_fallthru
        _
      %p143 = scmp.le.s32.totalorder 1, %s15
      %p144 = scmp.lt.s32.totalorder %s15, 3
      %p145 = pnand %p143, %p144
      %p146 = pneg %p145
      // Predicated region
      $region25: #{tpu_custom_call.1} parent=5 // pred_check
        _
      $region26: #{tpu_custom_call.1} parent=5 // pred_check_branch
        %148 = sbr.rel (%p145) target = $region28
      $region27: #{tpu_custom_call.1} parent=5 // pred_region
        %s149 = ssub.s32 %s15, 1
        %s150 = sand.u32 %s28, 1
        %s151 = scalar_lea.sflag [#allocation3], %s150
        %s152 = sand.u32 %s28, 1
        %s153 = smul.addr %s152, 16
        %s154 = scalar_lea.vmem [#allocation2], %s153
        // Predicated region
        $region29: #{tpu_custom_call.1} parent=27 // pred_check
          %p155 = pneg %p41
        $region30: #{tpu_custom_call.1} parent=27 // pred_check_branch
          %157 = sbr.rel (%p155) target = $region32
        $region31: #{tpu_custom_call.1} parent=27 // pred_region
          %159 = dma.done %s151, 256
        $region32: #{tpu_custom_call.1} parent=27 // pred_fallthru
          _
        // Predicated region
        $region33: #{tpu_custom_call.1} parent=27 // pred_check
          %p160 = pneg %p62
        $region34: #{tpu_custom_call.1} parent=27 // pred_check_branch
          %162 = sbr.rel (%p160) target = $region36
        $region35: #{tpu_custom_call.1} parent=27 // pred_region
          %164 = dma.done [#allocation6], 256
        $region36: #{tpu_custom_call.1} parent=27 // pred_fallthru
          _
        %s165 = sand.u32 %s28, 1
        %s166 = scalar_lea.sflag [#allocation3], %s165
        %s167 = sand.u32 %s28, 1
        %s168 = smul.addr %s167, 16
        %s169 = scalar_lea.vmem [#allocation2], %s168
        %p170 = pneg %p41
        %p171 = pneg %p38
        %p172 = pneg %p62
        %p173 = pneg %p59
        %p174 = pneg %p88
        %p175 = pneg %p85
        %s176 = sand.u32 %s75, 1
        %s177 = scalar_lea.sflag [#allocation4], %s176
        %s178 = sand.u32 %s75, 1
        %s179 = smul.addr %s178, 16
        %s180 = scalar_lea.vmem [#allocation7], %s179
        %s181 = smul.u32 2, %s20
        %s182 = smul.u32 2, %s20
        %v183 = vld [vmem:[%s154] sm:$0xff]
        %v184 = vld [vmem:[%s154 + $0x8] sm:$0xff]
        %v185 = vld [vmem:[#allocation5] sm:$0xff]
        %v186 = vld [vmem:[#allocation5 + $0x8] sm:$0xff]
        %v187 = vadd.f32 %v183, %v185
        %v188 = vadd.f32 %v184, %v186
        %189 = vst [vmem:[%s180] sm:$0xff] %v187
        %190 = vst [vmem:[%s180 + $0x8] sm:$0xff] %v188
        %s191 = sand.u32 %s75, 1
        %s192 = scalar_lea.sflag [#allocation4], %s191
        %s193 = sand.u32 %s75, 1
        %s194 = smul.addr %s193, 16
        %s195 = scalar_lea.vmem [#allocation7], %s194
        // Predicated region
        $region37: #{tpu_custom_call.1} parent=27 // pred_check
          %p196 = pneg %p85
        $region38: #{tpu_custom_call.1} parent=27 // pred_check_branch
          %198 = sbr.rel (%p196) target = $region40
        $region39: #{tpu_custom_call.1} parent=27 // pred_region
          %s199 = smul.u32 2, %s20
          %201 = vsyncadd %s192, 0
          %s202 = smul.addr %s199, 8
          %s203 = scalar_lea.hbm %s2, %s202
          %s204 = sshll.u32 %s195, 4
          %s205 = int_to_ptr.vmem [resolvable:$true] %s204
          %s206 = sshll.u32 %s203, 4
          %s207 = int_to_ptr.hbm [resolvable:$true] %s206
          %212 = dma.vmem_to_hbm [thread:$0]  %s205, 256, %s207, %s192, 128, 128, 8
        $region40: #{tpu_custom_call.1} parent=27 // pred_fallthru
          _
      $region28: #{tpu_custom_call.1} parent=5 // pred_fallthru
        _
      %p213 = scmp.le.s32.totalorder 2, %s15
      // Predicated region
      $region41: #{tpu_custom_call.1} parent=5 // pred_check
        %p214 = pneg %p213
      $region42: #{tpu_custom_call.1} parent=5 // pred_check_branch
        %216 = sbr.rel (%p214) target = $region44
      $region43: #{tpu_custom_call.1} parent=5 // pred_region
        %s217 = ssub.s32 %s15, 2
        // Predicated region
        $region45: #{tpu_custom_call.1} parent=43 // pred_check
          %p218 = pneg %p91
        $region46: #{tpu_custom_call.1} parent=43 // pred_check_branch
          %220 = sbr.rel (%p218) target = $region48
        $region47: #{tpu_custom_call.1} parent=43 // pred_region
          %s221 = sand.u32 %s76, 1
          %s222 = scalar_lea.sflag [#allocation4], %s221
          %s223 = sand.u32 %s76, 1
          %s224 = smul.addr %s223, 16
          %s225 = scalar_lea.vmem [#allocation7], %s224
          %227 = dma.done %s222, 256
        $region48: #{tpu_custom_call.1} parent=43 // pred_fallthru
          _
      $region44: #{tpu_custom_call.1} parent=5 // pred_fallthru
        _
    $region6: #{tpu_custom_call.1} parent=1 // loop_footer
      %s19 = sadd.s32 1, %s15
    $region7: #{tpu_custom_call.1} parent=1 // loop_footer_branch
      %14 = sbr.rel target = $region3
    $region8: #{tpu_custom_call.1} parent=1 // loop_exit
      _
    %228 = vsyncpa [#allocation3], 1
    %s229 = scalar_lea.sflag [#allocation3], 1
    %230 = vsyncpa %s229, 1
    %231 = vsyncpa [#allocation6], 1
    %232 = vsyncpa [#allocation4], 1
    %s233 = scalar_lea.sflag [#allocation4], 1
    %234 = vsyncpa %s233, 1

// kernel: _forward_impl.1
$region0: #{_forward_impl.1}
  #allocation0 [shape = 'u32[]', space=smem, size = 0x4, offset = 0x4, fixed_abs, tag = 'smem constant byte address 0x4 - core index']
  #allocation1 [shape = 'u32[72,128]{1,0:T(1,128)}', space=vmem, size = 0x9000, scoped, tag = 'internal scratch']
  %s0 = inlined_call_operand.vmem [shape: bf16[16,128], index: 0, kind: input, shape index: {}]
  %s1 = inlined_call_operand.hbm [shape: bf16[128,128], index: 1, kind: input, shape index: {}]
  %s2 = inlined_call_operand.vmem [shape: f32[1,128], index: 2, kind: input, shape index: {}]
  %s3 = inlined_call_operand.hbm [shape: bf16[128,128], index: 3, kind: input, shape index: {}]
  %s4 = inlined_call_operand.vmem [shape: f32[1,128], index: 4, kind: input, shape index: {}]
  %s5 = inlined_call_operand.hbm [shape: bf16[128,384], index: 5, kind: input, shape index: {}]
  %s6 = inlined_call_operand.vmem [shape: f32[1,384], index: 6, kind: input, shape index: {}]
  %s7 = inlined_call_operand.vmem [shape: f32[1,128], index: 7, kind: input, shape index: {}]
  %s8 = inlined_call_operand.vmem [shape: f32[1,128], index: 8, kind: input, shape index: {}]
  %s9 = inlined_call_operand.vmem [shape: f32[16,640], index: 9, kind: output, shape index: {}]
  %s10 = sld [smem:[#allocation0]]
  $region58: #{_forward_impl.1} parent=0
    _
  %s12 = ssub.s32 1, %s10
  %s13 = scalar_select 0, %s12, %s10
  $region1: #{_forward_impl.1} parent=0
    #allocation2 [shape = 'u8[32768]{0}', space=vmem, size = 0x8000, scoped, tag = 'input window, operand 1, single buffered']
    #allocation3 [shape = 's32[1]{0}', space=sflag, size = 0x4, scoped, tag = 'scoped memory for _forward_impl.1']
    #allocation4 [shape = 'u8[32768]{0}', space=vmem, size = 0x8000, scoped, tag = 'input window, operand 3, single buffered']
    #allocation5 [shape = 's32[1]{0}', space=sflag, size = 0x4, scoped, tag = 'scoped memory for _forward_impl.1']
    #allocation6 [shape = 'u8[98304]{0}', space=vmem, size = 0x18000, scoped, tag = 'input window, operand 5, single buffered']
    %14 = vsyncpa [#allocation3], 0
    %15 = vsyncpa [#allocation5], 0
    // Predicated region
    $region2: #{_forward_impl.1} parent=1 // pred_check
      _
    $region3: #{_forward_impl.1} parent=1 // pred_check_branch
      %17 = sbr.rel (0) target = $region5
    $region4: #{_forward_impl.1} parent=1 // pred_region
      _
    $region5: #{_forward_impl.1} parent=1 // pred_fallthru
      _
    // Predicated region
    $region6: #{_forward_impl.1} parent=1 // pred_check
      _
    $region7: #{_forward_impl.1} parent=1 // pred_check_branch
      %19 = sbr.rel (0) target = $region9
    $region8: #{_forward_impl.1} parent=1 // pred_region
      %21 = vsyncadd [#allocation3], 0
      %s22 = sshll.u32 %s1, 4
      %s23 = int_to_ptr.hbm [resolvable:$true] %s22
      %s24 = sshll.u32 [#allocation2], 4
      %s25 = int_to_ptr.vmem [resolvable:$true] %s24
      %30 = dma.hbm_to_vmem [thread:$0]  %s23, 1024, %s25, [#allocation3], 64, 64, 4
    $region9: #{_forward_impl.1} parent=1 // pred_fallthru
      _
    // Predicated region
    $region10: #{_forward_impl.1} parent=1 // pred_check
      _
    $region11: #{_forward_impl.1} parent=1 // pred_check_branch
      %32 = sbr.rel (0) target = $region13
    $region12: #{_forward_impl.1} parent=1 // pred_region
      _
    $region13: #{_forward_impl.1} parent=1 // pred_fallthru
      _
    // Predicated region
    $region14: #{_forward_impl.1} parent=1 // pred_check
      _
    $region15: #{_forward_impl.1} parent=1 // pred_check_branch
      %34 = sbr.rel (0) target = $region17
    $region16: #{_forward_impl.1} parent=1 // pred_region
      %36 = vsyncadd [#allocation5], 0
      %s37 = sshll.u32 %s3, 4
      %s38 = int_to_ptr.hbm [resolvable:$true] %s37
      %s39 = sshll.u32 [#allocation4], 4
      %s40 = int_to_ptr.vmem [resolvable:$true] %s39
      %45 = dma.hbm_to_vmem [thread:$0]  %s38, 1024, %s40, [#allocation5], 64, 64, 4
    $region17: #{_forward_impl.1} parent=1 // pred_fallthru
      _
    // Predicated region
    $region18: #{_forward_impl.1} parent=1 // pred_check
      _
    $region19: #{_forward_impl.1} parent=1 // pred_check_branch
      %47 = sbr.rel (0) target = $region21
    $region20: #{_forward_impl.1} parent=1 // pred_region
      _
    $region21: #{_forward_impl.1} parent=1 // pred_fallthru
      _
    // Predicated region
    $region22: #{_forward_impl.1} parent=1 // pred_check
      _
    $region23: #{_forward_impl.1} parent=1 // pred_check_branch
      %49 = sbr.rel (0) target = $region25
    $region24: #{_forward_impl.1} parent=1 // pred_region
      %51 = vsyncadd [#allocation5], 0
      %s52 = sshll.u32 %s5, 4
      %s53 = int_to_ptr.hbm [resolvable:$true] %s52
      %s54 = sshll.u32 [#allocation6], 4
      %s55 = int_to_ptr.vmem [resolvable:$true] %s54
      %60 = dma.hbm_to_vmem [thread:$0]  %s53, 3072, %s55, [#allocation5], 192, 192, 12
    $region25: #{_forward_impl.1} parent=1 // pred_fallthru
      _
    // Predicated region
    $region26: #{_forward_impl.1} parent=1 // pred_check
      _
    $region27: #{_forward_impl.1} parent=1 // pred_check_branch
      %62 = sbr.rel (0) target = $region29
    $region28: #{_forward_impl.1} parent=1 // pred_region
      _
    $region29: #{_forward_impl.1} parent=1 // pred_fallthru
      _
    // Predicated region
    $region30: #{_forward_impl.1} parent=1 // pred_check
      _
    $region31: #{_forward_impl.1} parent=1 // pred_check_branch
      %64 = sbr.rel (0) target = $region33
    $region32: #{_forward_impl.1} parent=1 // pred_region
      _
    $region33: #{_forward_impl.1} parent=1 // pred_fallthru
      _
    // Predicated region
    $region34: #{_forward_impl.1} parent=1 // pred_check
      _
    $region35: #{_forward_impl.1} parent=1 // pred_check_branch
      %66 = sbr.rel (0) target = $region37
    $region36: #{_forward_impl.1} parent=1 // pred_region
      _
    $region37: #{_forward_impl.1} parent=1 // pred_fallthru
      _
    // Predicated region
    $region38: #{_forward_impl.1} parent=1 // pred_check
      _
    $region39: #{_forward_impl.1} parent=1 // pred_check_branch
      %68 = sbr.rel (0) target = $region41
    $region40: #{_forward_impl.1} parent=1 // pred_region
      %70 = dma.done [#allocation3], 1024
    $region41: #{_forward_impl.1} parent=1 // pred_fallthru
      _
    // Predicated region
    $region42: #{_forward_impl.1} parent=1 // pred_check
      _
    $region43: #{_forward_impl.1} parent=1 // pred_check_branch
      %72 = sbr.rel (0) target = $region45
    $region44: #{_forward_impl.1} parent=1 // pred_region
      %74 = dma.done [#allocation5], 1024
    $region45: #{_forward_impl.1} parent=1 // pred_fallthru
      _
    // Predicated region
    $region46: #{_forward_impl.1} parent=1 // pred_check
      _
    $region47: #{_forward_impl.1} parent=1 // pred_check_branch
      %76 = sbr.rel (0) target = $region49
    $region48: #{_forward_impl.1} parent=1 // pred_region
      %78 = dma.done [#allocation5], 3072
    $region49: #{_forward_impl.1} parent=1 // pred_fallthru
      _
    %v79 = vld [vmem:[%s0] sm:$0xf]
    %v80 = vld [vmem:[%s0 + $0x4] sm:$0xf]
    %v81 = vld [vmem:[#allocation2] sm:$0xf]
    %v82 = vld [vmem:[#allocation2 + $0x4] sm:$0xf]
    %v83 = vld [vmem:[#allocation2 + $0x8] sm:$0xf]
    %v84 = vld [vmem:[#allocation2 + $0xc] sm:$0xf]
    %v85 = vld [vmem:[#allocation2 + $0x10] sm:$0xf]
    %v86 = vld [vmem:[#allocation2 + $0x14] sm:$0xf]
    %v87 = vld [vmem:[#allocation2 + $0x18] sm:$0xf]
    %v88 = vld [vmem:[#allocation2 + $0x1c] sm:$0xf]
    %v89 = vld [vmem:[#allocation2 + $0x20] sm:$0xf]
    %v90 = vld [vmem:[#allocation2 + $0x24] sm:$0xf]
    %v91 = vld [vmem:[#allocation2 + $0x28] sm:$0xf]
    %v92 = vld [vmem:[#allocation2 + $0x2c] sm:$0xf]
    %v93 = vld [vmem:[#allocation2 + $0x30] sm:$0xf]
    %v94 = vld [vmem:[#allocation2 + $0x34] sm:$0xf]
    %v95 = vld [vmem:[#allocation2 + $0x38] sm:$0xf]
    %v96 = vld [vmem:[#allocation2 + $0x3c] sm:$0xf]
    %v97 = vld [vmem:[%s2] sm:$0x1]
    %v99 = vperm.slane %v97, 0
    %v103 = vunpack.c.l.b16 %v79
    %v104 = vunpack.c.l.b16 %v80
    %v105 = vpack.c.b16 %v104, %v103
    %v123 = vunpack.c.l.b16 %v81
    %v124 = vunpack.c.l.b16 %v82
    %v125 = vunpack.c.l.b16 %v83
    %v126 = vunpack.c.l.b16 %v84
    %v127 = vunpack.c.l.b16 %v85
    %v128 = vunpack.c.l.b16 %v86
    %v129 = vunpack.c.l.b16 %v87
    %v130 = vunpack.c.l.b16 %v88
    %v131 = vunpack.c.l.b16 %v89
    %v132 = vunpack.c.l.b16 %v90
    %v133 = vunpack.c.l.b16 %v91
    %v134 = vunpack.c.l.b16 %v92
    %v135 = vunpack.c.l.b16 %v93
    %v136 = vunpack.c.l.b16 %v94
    %v137 = vunpack.c.l.b16 %v95
    %v138 = vunpack.c.l.b16 %v96
    %v139 = vpack.c.b16 %v124, %v123
    %v140 = vpack.c.b16 %v126, %v125
    %v141 = vpack.c.b16 %v128, %v127
    %v142 = vpack.c.b16 %v130, %v129
    %v143 = vpack.c.b16 %v132, %v131
    %v144 = vpack.c.b16 %v134, %v133
    %v145 = vpack.c.b16 %v136, %v135
    %v146 = vpack.c.b16 %v138, %v137
    %155 = vmatpush.bf16.msra.mxu0 %v146
    %156 = vmatpush.bf16.msra.mxu0 %v145
    %157 = vmatpush.bf16.msra.mxu0 %v144
    %158 = vmatpush.bf16.msra.mxu0 %v143
    %159 = vmatpush.bf16.msra.mxu0 %v142
    %160 = vmatpush.bf16.msra.mxu0 %v141
    %161 = vmatpush.bf16.msra.mxu0 %v140
    %162 = vmatpush.bf16.msra.mxu0 %v139
    %163 = vmatmul.bf16.gmra.mxu0 %v105
    %v164 = vpop.f32.mrf.mxu0
    %v165 = vadd.f32 %v99, %v164
    %v166 = vpop.f32.mrf.mxu0
    %v167 = vadd.f32 %v99, %v166
    %168 = vdwg.mxu0
    %v169 = vmax.f32 %v165, 0.0
    %v170 = vmax.f32 %v167, 0.0
    %v171 = vpack.c.bf16 %v170, %v169
    %v172 = vld [vmem:[#allocation4] sm:$0xf]
    %v173 = vld [vmem:[#allocation4 + $0x4] sm:$0xf]
    %v174 = vld [vmem:[#allocation4 + $0x8] sm:$0xf]
    %v175 = vld [vmem:[#allocation4 + $0xc] sm:$0xf]
    %v176 = vld [vmem:[#allocation4 + $0x10] sm:$0xf]
    %v177 = vld [vmem:[#allocation4 + $0x14] sm:$0xf]
    %v178 = vld [vmem:[#allocation4 + $0x18] sm:$0xf]
    %v179 = vld [vmem:[#allocation4 + $0x1c] sm:$0xf]
    %v180 = vld [vmem:[#allocation4 + $0x20] sm:$0xf]
    %v181 = vld [vmem:[#allocation4 + $0x24] sm:$0xf]
    %v182 = vld [vmem:[#allocation4 + $0x28] sm:$0xf]
    %v183 = vld [vmem:[#allocation4 + $0x2c] sm:$0xf]
    %v184 = vld [vmem:[#allocation4 + $0x30] sm:$0xf]
    %v185 = vld [vmem:[#allocation4 + $0x34] sm:$0xf]
    %v186 = vld [vmem:[#allocation4 + $0x38] sm:$0xf]
    %v187 = vld [vmem:[#allocation4 + $0x3c] sm:$0xf]
    %v188 = vld [vmem:[%s4] sm:$0x1]
    %v190 = vperm.slane %v188, 0
    %v208 = vunpack.c.l.b16 %v172
    %v209 = vunpack.c.l.b16 %v173
    %v210 = vunpack.c.l.b16 %v174
    %v211 = vunpack.c.l.b16 %v175
    %v212 = vunpack.c.l.b16 %v176
    %v213 = vunpack.c.l.b16 %v177
    %v214 = vunpack.c.l.b16 %v178
    %v215 = vunpack.c.l.b16 %v179
    %v216 = vunpack.c.l.b16 %v180
    %v217 = vunpack.c.l.b16 %v181
    %v218 = vunpack.c.l.b16 %v182
    %v219 = vunpack.c.l.b16 %v183
    %v220 = vunpack.c.l.b16 %v184
    %v221 = vunpack.c.l.b16 %v185
    %v222 = vunpack.c.l.b16 %v186
    %v223 = vunpack.c.l.b16 %v187
    %v224 = vpack.c.b16 %v209, %v208
    %v225 = vpack.c.b16 %v211, %v210
    %v226 = vpack.c.b16 %v213, %v212
    %v227 = vpack.c.b16 %v215, %v214
    %v228 = vpack.c.b16 %v217, %v216
    %v229 = vpack.c.b16 %v219, %v218
    %v230 = vpack.c.b16 %v221, %v220
    %v231 = vpack.c.b16 %v223, %v222
    %240 = vmatpush.bf16.msra.mxu0 %v231
    %241 = vmatpush.bf16.msra.mxu0 %v230
    %242 = vmatpush.bf16.msra.mxu0 %v229
    %243 = vmatpush.bf16.msra.mxu0 %v228
    %244 = vmatpush.bf16.msra.mxu0 %v227
    %245 = vmatpush.bf16.msra.mxu0 %v226
    %246 = vmatpush.bf16.msra.mxu0 %v225
    %247 = vmatpush.bf16.msra.mxu0 %v224
    %248 = vmatmul.bf16.gmra.mxu0 %v171
    %v249 = vpop.f32.mrf.mxu0
    %v250 = vadd.f32 %v190, %v249
    %v251 = vpop.f32.mrf.mxu0
    %v252 = vadd.f32 %v190, %v251
    %253 = vdwg.mxu0
    %v254 = vmax.f32 %v250, 0.0
    %v255 = vmax.f32 %v252, 0.0
    %v256 = vpack.c.bf16 %v255, %v254
    %v257 = vld [vmem:[#allocation6] sm:$0xff]
    %v258 = vld [vmem:[#allocation6 + $0x8] sm:$0xf]
    %v259 = vld [vmem:[#allocation6 + $0xc] sm:$0xff]
    %v260 = vld [vmem:[#allocation6 + $0x14] sm:$0xf]
    %v261 = vld [vmem:[#allocation6 + $0x18] sm:$0xff]
    %v262 = vld [vmem:[#allocation6 + $0x20] sm:$0xf]
    %v263 = vld [vmem:[#allocation6 + $0x24] sm:$0xff]
    %v264 = vld [vmem:[#allocation6 + $0x2c] sm:$0xf]
    %v265 = vld [vmem:[#allocation6 + $0x30] sm:$0xff]
    %v266 = vld [vmem:[#allocation6 + $0x38] sm:$0xf]
    %v267 = vld [vmem:[#allocation6 + $0x3c] sm:$0xff]
    %v268 = vld [vmem:[#allocation6 + $0x44] sm:$0xf]
    %v269 = vld [vmem:[#allocation6 + $0x48] sm:$0xff]
    %v270 = vld [vmem:[#allocation6 + $0x50] sm:$0xf]
    %v271 = vld [vmem:[#allocation6 + $0x54] sm:$0xff]
    %v272 = vld [vmem:[#allocation6 + $0x5c] sm:$0xf]
    %v273 = vld [vmem:[#allocation6 + $0x60] sm:$0xff]
    %v274 = vld [vmem:[#allocation6 + $0x68] sm:$0xf]
    %v275 = vld [vmem:[#allocation6 + $0x6c] sm:$0xff]
    %v276 = vld [vmem:[#allocation6 + $0x74] sm:$0xf]
    %v277 = vld [vmem:[#allocation6 + $0x78] sm:$0xff]
    %v278 = vld [vmem:[#allocation6 + $0x80] sm:$0xf]
    %v279 = vld [vmem:[#allocation6 + $0x84] sm:$0xff]
    %v280 = vld [vmem:[#allocation6 + $0x8c] sm:$0xf]
    %v281 = vld [vmem:[#allocation6 + $0x90] sm:$0xff]
    %v282 = vld [vmem:[#allocation6 + $0x98] sm:$0xf]
    %v283 = vld [vmem:[#allocation6 + $0x9c] sm:$0xff]
    %v284 = vld [vmem:[#allocation6 + $0xa4] sm:$0xf]
    %v285 = vld [vmem:[#allocation6 + $0xa8] sm:$0xff]
    %v286 = vld [vmem:[#allocation6 + $0xb0] sm:$0xf]
    %v287 = vld [vmem:[#allocation6 + $0xb4] sm:$0xff]
    %v288 = vld [vmem:[#allocation6 + $0xbc] sm:$0xf]
    %v289 = vld [vmem:[%s6] sm:$0x7]
    %v291 = vperm.slane %v289, 0
    %v292 = vperm.slane %v289, 1
    %v293 = vperm.slane %v289, 2
    %v329 = vunpack.c.l.b16 %v257
    %v330 = vunpack.c.h.b16 %v257
    %v331 = vunpack.c.l.b16 %v258
    %v332 = vunpack.c.l.b16 %v259
    %v333 = vunpack.c.h.b16 %v259
    %v334 = vunpack.c.l.b16 %v260
    %v335 = vunpack.c.l.b16 %v261
    %v336 = vunpack.c.h.b16 %v261
    %v337 = vunpack.c.l.b16 %v262
    %v338 = vunpack.c.l.b16 %v263
    %v339 = vunpack.c.h.b16 %v263
    %v340 = vunpack.c.l.b16 %v264
    %v341 = vunpack.c.l.b16 %v265
    %v342 = vunpack.c.h.b16 %v265
    %v343 = vunpack.c.l.b16 %v266
    %v344 = vunpack.c.l.b16 %v267
    %v345 = vunpack.c.h.b16 %v267
    %v346 = vunpack.c.l.b16 %v268
    %v347 = vunpack.c.l.b16 %v269
    %v348 = vunpack.c.h.b16 %v269
    %v349 = vunpack.c.l.b16 %v270
    %v350 = vunpack.c.l.b16 %v271
    %v351 = vunpack.c.h.b16 %v271
    %v352 = vunpack.c.l.b16 %v272
    %v353 = vunpack.c.l.b16 %v273
    %v354 = vunpack.c.h.b16 %v273
    %v355 = vunpack.c.l.b16 %v274
    %v356 = vunpack.c.l.b16 %v275
    %v357 = vunpack.c.h.b16 %v275
    %v358 = vunpack.c.l.b16 %v276
    %v359 = vunpack.c.l.b16 %v277
    %v360 = vunpack.c.h.b16 %v277
    %v361 = vunpack.c.l.b16 %v278
    %v362 = vunpack.c.l.b16 %v279
    %v363 = vunpack.c.h.b16 %v279
    %v364 = vunpack.c.l.b16 %v280
    %v365 = vunpack.c.l.b16 %v281
    %v366 = vunpack.c.h.b16 %v281
    %v367 = vunpack.c.l.b16 %v282
    %v368 = vunpack.c.l.b16 %v283
    %v369 = vunpack.c.h.b16 %v283
    %v370 = vunpack.c.l.b16 %v284
    %v371 = vunpack.c.l.b16 %v285
    %v372 = vunpack.c.h.b16 %v285
    %v373 = vunpack.c.l.b16 %v286
    %v374 = vunpack.c.l.b16 %v287
    %v375 = vunpack.c.h.b16 %v287
    %v376 = vunpack.c.l.b16 %v288
    %v377 = vpack.c.b16 %v332, %v329
    %v378 = vpack.c.b16 %v333, %v330
    %v379 = vpack.c.b16 %v334, %v331
    %v380 = vpack.c.b16 %v338, %v335
    %v381 = vpack.c.b16 %v339, %v336
    %v382 = vpack.c.b16 %v340, %v337
    %v383 = vpack.c.b16 %v344, %v341
    %v384 = vpack.c.b16 %v345, %v342
    %v385 = vpack.c.b16 %v346, %v343
    %v386 = vpack.c.b16 %v350, %v347
    %v387 = vpack.c.b16 %v351, %v348
    %v388 = vpack.c.b16 %v352, %v349
    %v389 = vpack.c.b16 %v356, %v353
    %v390 = vpack.c.b16 %v357, %v354
    %v391 = vpack.c.b16 %v358, %v355
    %v392 = vpack.c.b16 %v362, %v359
    %v393 = vpack.c.b16 %v363, %v360
    %v394 = vpack.c.b16 %v364, %v361
    %v395 = vpack.c.b16 %v368, %v365
    %v396 = vpack.c.b16 %v369, %v366
    %v397 = vpack.c.b16 %v370, %v367
    %v398 = vpack.c.b16 %v374, %v371
    %v399 = vpack.c.b16 %v375, %v372
    %v400 = vpack.c.b16 %v376, %v373
    %425 = vmatpush.bf16.msra.mxu0 %v398
    %426 = vmatpush.bf16.msra.mxu0 %v395
    %427 = vmatpush.bf16.msra.mxu0 %v392
    %428 = vmatpush.bf16.msra.mxu0 %v389
    %429 = vmatpush.bf16.msra.mxu0 %v386
    %430 = vmatpush.bf16.msra.mxu0 %v383
    %431 = vmatpush.bf16.msra.mxu0 %v380
    %432 = vmatpush.bf16.msra.mxu0 %v377
    %433 = vmatmul.bf16.gmra.mxu0 %v256
    %v434 = vpop.f32.mrf.mxu0
    %v435 = vadd.f32 %v291, %v434
    %v436 = vpop.f32.mrf.mxu0
    %v437 = vadd.f32 %v291, %v436
    %438 = vdwg.mxu0
    %439 = vmatpush.bf16.msra.mxu0 %v399
    %440 = vmatpush.bf16.msra.mxu0 %v396
    %441 = vmatpush.bf16.msra.mxu0 %v393
    %442 = vmatpush.bf16.msra.mxu0 %v390
    %443 = vmatpush.bf16.msra.mxu0 %v387
    %444 = vmatpush.bf16.msra.mxu0 %v384
    %445 = vmatpush.bf16.msra.mxu0 %v381
    %446 = vmatpush.bf16.msra.mxu0 %v378
    %447 = vmatmul.bf16.gmra.mxu0 %v256
    %v448 = vpop.f32.mrf.mxu0
    %v449 = vadd.f32 %v292, %v448
    %v450 = vpop.f32.mrf.mxu0
    %v451 = vadd.f32 %v292, %v450
    %452 = vdwg.mxu0
    %453 = vmatpush.bf16.msra.mxu0 %v400
    %454 = vmatpush.bf16.msra.mxu0 %v397
    %455 = vmatpush.bf16.msra.mxu0 %v394
    %456 = vmatpush.bf16.msra.mxu0 %v391
    %457 = vmatpush.bf16.msra.mxu0 %v388
    %458 = vmatpush.bf16.msra.mxu0 %v385
    %459 = vmatpush.bf16.msra.mxu0 %v382
    %460 = vmatpush.bf16.msra.mxu0 %v379
    %461 = vmatmul.bf16.gmra.mxu0 %v256
    %v462 = vpop.f32.mrf.mxu0
    %v463 = vadd.f32 %v293, %v462
    %v464 = vpop.f32.mrf.mxu0
    %v465 = vadd.f32 %v293, %v464
    %466 = vdwg.mxu0
    %v467 = vtanh.pop %v435
    %v468 = vtanh.pop %v437
    %v469 = vmax.f32 %v449, 0.0
    %v470 = vmax.f32 %v451, 0.0
    %v471 = vand.u32 2147483647, %v449
    %v472 = vand.u32 2147483647, %v451
    %v473 = vsub.f32 0.0, %v471
    %v474 = vsub.f32 0.0, %v472
    %v475 = vmul.f32 %v473, 1.442695
    %v476 = vpow.pop %v475
    %v477 = vmul.f32 %v474, 1.442695
    %v478 = vpow.pop %v477
    %v479 = vadd.f32 %v476, 1.0
    %v480 = vlog2.pop %v479
    %v481 = vmul.f32 %v480, 0.6931472
    %v482 = vmul.f32 -0.5, %v476
    %v483 = vadd.f32 %v482, 1.0
    %v484 = vmul.f32 %v483, %v476
    %v485 = vand.u32 2147483647, %v476
    %vm486 = vcmp.lt.f32.partialorder %v485, 0.0004427343
    %v487 = vsel %vm486, %v484, %v481
    %v488 = vadd.f32 %v478, 1.0
    %v489 = vlog2.pop %v488
    %v490 = vmul.f32 %v489, 0.6931472
    %v491 = vmul.f32 -0.5, %v478
    %v492 = vadd.f32 %v491, 1.0
    %v493 = vmul.f32 %v492, %v478
    %v494 = vand.u32 2147483647, %v478
    %vm495 = vcmp.lt.f32.partialorder %v494, 0.0004427343
    %v496 = vsel %vm495, %v493, %v490
    %v497 = vadd.f32 %v469, %v487
    %v498 = vadd.f32 %v470, %v496
    %v499 = vld [vmem:[%s7] sm:$0x1]
    %v501 = vperm.slane %v499, 0
    %v503 = vmul.f32 %v497, %v501
    %v504 = vmul.f32 %v498, %v501
    %v505 = vadd.f32 %v467, %v503
    %v506 = vadd.f32 %v468, %v504
    %v507 = vld [vmem:[%s8] sm:$0x1]
    %v508 = vlog2.pop %v497
    %v509 = vmul.f32 %v508, 0.6931472
    %v510 = vlog2.pop %v498
    %v511 = vmul.f32 %v510, 0.6931472
    %v513 = vperm.slane %v507, 0
    %v515 = vsub.f32 %v513, %v509
    %v516 = vsub.f32 %v513, %v511
    %517 = vst [vmem:[%s9] sm:$0xff] %v505
    %518 = vst [vmem:[%s9 + $0x28] sm:$0xff] %v506
    %519 = vst [vmem:[%s9 + $0x8] sm:$0xff] %v515
    %520 = vst [vmem:[%s9 + $0x30] sm:$0xff] %v516
    %521 = vst [vmem:[%s9 + $0x10] sm:$0xff] %v467
    %522 = vst [vmem:[%s9 + $0x38] sm:$0xff] %v468
    %523 = vst [vmem:[%s9 + $0x18] sm:$0xff] %v497
    %524 = vst [vmem:[%s9 + $0x40] sm:$0xff] %v498
    %525 = vst [vmem:[%s9 + $0x20] sm:$0xff] %v463
    %526 = vst [vmem:[%s9 + $0x48] sm:$0xff] %v465
    // Predicated region
    $region50: #{_forward_impl.1} parent=1 // pred_check
      _
    $region51: #{_forward_impl.1} parent=1 // pred_check_branch
      %528 = sbr.rel (0) target = $region53
    $region52: #{_forward_impl.1} parent=1 // pred_region
      _
    $region53: #{_forward_impl.1} parent=1 // pred_fallthru
      _
    // Predicated region
    $region54: #{_forward_impl.1} parent=1 // pred_check
      _
    $region55: #{_forward_impl.1} parent=1 // pred_check_branch
      %530 = sbr.rel (0) target = $region57
    $region56: #{_forward_impl.1} parent=1 // pred_region
      _
    $region57: #{_forward_impl.1} parent=1 // pred_fallthru
      _
    %531 = vsyncpa [#allocation3], 1
    %532 = vsyncpa [#allocation5], 1

</llo_original>
